<compile_context>
chip_gen: v6e
topology: v6e:2x2x1
jax: 0.10.0
libtpu: 0.0.40
codegen_flags: <defaults>
</compile_context>

<pallas_src>
import functools
import math

import jax
import jax.numpy as jnp
from jax.experimental import pallas as pl
from jax.experimental.pallas import tpu as pltpu

LANE = 128                              # d_model padded to a multiple of this on Path B
SUBLANE = 8                             # token tiles kept a multiple of this
VMEM_LIMIT_BYTES = 32 * 1024 * 1024     # fits v5e/v6e; under v7x's 64 MiB physical VMEM


def _round_up(x, m):
    return (x + m - 1) // m * m


# ---------------------------------------------------------------------------
# Path A kernel: table resident in VMEM, exact one-hot gather on the MXU.
# ---------------------------------------------------------------------------
def _vmem_gather_kernel(ids_ref,   # VMEM (TM, 1) int32  token ids for this tile
                        tbl_ref,   # VMEM (V, D)         whole table (resident)
                        out_ref,   # VMEM (TM, D)        output tile
                        *, scale):
    tm = ids_ref.shape[0]
    vocab = tbl_ref.shape[0]
    ids = ids_ref[...]                                             # (TM, 1)
    # One-hot gather: rows of exactly 0.0 / 1.0, f32 MXU accumulation -> exact.
    iota = jax.lax.broadcasted_iota(jnp.int32, (tm, vocab), 1)     # (TM, V)
    onehot = (iota == ids).astype(tbl_ref.dtype)                   # (TM, V)
    gathered = jnp.dot(onehot, tbl_ref[...],
                       preferred_element_type=jnp.float32)         # (TM, D) f32
    out_ref[...] = (gathered * scale).astype(out_ref.dtype)


# ---------------------------------------------------------------------------
# Path B kernel: table in HBM, per-row DMA gather into the lane-dense output.
# ---------------------------------------------------------------------------
def _hbm_gather_kernel(ids_ref,    # SMEM (N_pad,) int32 token ids (scalar prefetch)
                       tbl_hbm,    # HBM  (V, Dp)        embedding table (pl.ANY)
                       out_ref,    # VMEM (TM, Dp)       output tile
                       sems,       # DMA semaphores, shape (TM,)
                       *, tokens_per_block, scale):
    base = pl.program_id(0) * tokens_per_block

    # Issue all row-gather DMAs for this tile; they run concurrently and land
    # directly in the (double-buffered) output block, so writeback of tile i-1
    # overlaps this tile's gather.  All SMEM id reads precede the first wait.
    copies = []
    for t in range(tokens_per_block):        # static unroll (TM capped at ~64)
        row = ids_ref[base + t]              # scalar read from SMEM
        cp = pltpu.make_async_copy(
            tbl_hbm.at[pl.ds(row, 1), :],    # (1, Dp) row in HBM
            out_ref.at[pl.ds(t, 1), :],      # (1, Dp) slot in the output block
            sems.at[t])
        cp.start()
        copies.append(cp)
    for cp in copies:
        cp.wait()

    # Single full-width VPU pass for the sqrt(d_model) scale.
    out_ref[...] = out_ref[...] * jnp.asarray(scale, out_ref.dtype)


class InputEmbeddings:
    """Pallas TPU equivalent of `nn.Embedding(V, D)(x) * sqrt(D)`.

    Construct once (table padding, if any, happens here) and call like the
    PyTorch module.  `tokens_per_block` guidance: v5e ~32-64, v6e 64+,
    v7x 64-128 keeping 2 * TM * Dp * itemsize well under ~16 MiB of VMEM.
    """

    def __init__(self, emb_table, *, tokens_per_block=64,
                 small_vocab_max=2048, vmem_table_budget=8 * 1024 * 1024):
        V, D = emb_table.shape
        self.vocab_size = V
        self.d_model = D
        self.scale = float(math.sqrt(D))
        self.tokens_per_block = tokens_per_block

        tbl_bytes = V * D * jnp.dtype(emb_table.dtype).itemsize
        self.use_vmem_path = (V <= small_vocab_max and tbl_bytes <= vmem_table_budget)

        if self.use_vmem_path:
            self.d_padded = D            # Path A needs no padding at all
            self.table = emb_table
        else:
            # Pad d_model to a lane-dense multiple of 128 ONCE, here (unmasked
            # `vst` stores in the kernel).  Vocab is deliberately NOT padded.
            self.d_padded = _round_up(D, LANE)
            self.table = (emb_table if self.d_padded == D
                          else jnp.pad(emb_table, ((0, 0), (0, self.d_padded - D))))

    def __call__(self, token_ids):
        orig_shape = token_ids.shape
        ids = token_ids.reshape(-1).astype(jnp.int32)
        # Clamp (same as jnp.take's default clip mode); also guarantees a bad
        # id can never become an out-of-bounds HBM DMA in Path B.
        ids = jnp.clip(ids, 0, self.vocab_size - 1)
        n = ids.shape[0]

        tm = self.tokens_per_block
        if n < tm:                               # shrink tile for tiny inputs
            tm = max(SUBLANE, _round_up(n, SUBLANE))
        n_pad = _round_up(n, tm)
        if n_pad != n:
            ids = jnp.pad(ids, (0, n_pad - n))   # padded ids gather row 0 (valid)
        grid = (n_pad // tm,)

        if self.use_vmem_path:
            out = self._gather_vmem(ids, tm, grid, n_pad)
        else:
            out = self._gather_hbm(ids, tm, grid, n_pad)

        # Extra HBM pass only when padding was actually introduced.
        if n_pad != n or out.shape[1] != self.d_model:
            out = out[:n, :self.d_model]
        return out.reshape(*orig_shape, self.d_model)

    # --- Path A ------------------------------------------------------------
    def _gather_vmem(self, ids, tm, grid, n_pad):
        V, D = self.vocab_size, self.d_model
        kernel = functools.partial(_vmem_gather_kernel, scale=self.scale)
        return pl.pallas_call(
            kernel,
            out_shape=jax.ShapeDtypeStruct((n_pad, D), self.table.dtype),
            grid_spec=pltpu.PrefetchScalarGridSpec(
                num_scalar_prefetch=0,
                grid=grid,
                in_specs=[
                    # Per-tile ids, (TM, 1) so they broadcast against the vocab
                    # iota along lanes inside the kernel.
                    pl.BlockSpec((tm, 1), lambda i: (i, 0)),
                    # Whole table, constant index map -> resident in VMEM, read
                    # from HBM once per call instead of once per token.
                    pl.BlockSpec((V, D), lambda i: (0, 0)),
                ],
                out_specs=pl.BlockSpec((tm, D), lambda i: (i, 0)),
            ),
            compiler_params=pltpu.CompilerParams(
                dimension_semantics=("parallel",),
                vmem_limit_bytes=VMEM_LIMIT_BYTES),
        )(ids.reshape(n_pad, 1), self.table)

    # --- Path B ------------------------------------------------------------
    def _gather_hbm(self, ids, tm, grid, n_pad):
        dp = self.d_padded
        kernel = functools.partial(_hbm_gather_kernel,
                                   tokens_per_block=tm, scale=self.scale)
        return pl.pallas_call(
            kernel,
            out_shape=jax.ShapeDtypeStruct((n_pad, dp), self.table.dtype),
            grid_spec=pltpu.PrefetchScalarGridSpec(
                num_scalar_prefetch=1,                       # ids -> SMEM
                grid=grid,
                in_specs=[pl.BlockSpec(memory_space=pl.ANY)],  # table stays in HBM
                out_specs=pl.BlockSpec((tm, dp), lambda i, ids: (i, 0)),
                scratch_shapes=[pltpu.SemaphoreType.DMA((tm,))],
            ),
            compiler_params=pltpu.CompilerParams(
                dimension_semantics=("parallel",),           # v7x: 2-TC sharding
                vmem_limit_bytes=VMEM_LIMIT_BYTES),
        )(ids, self.table)


def input_embeddings(token_ids, emb_table, **kwargs):
    """One-shot functional wrapper.  For repeated use, build `InputEmbeddings`
    once so any table padding happens a single time, not per call."""
    return InputEmbeddings(emb_table, **kwargs)(token_ids)


def input_embeddings_ref(token_ids, emb_table):
    """Pure-JAX reference mirroring the PyTorch module."""
    d_model = emb_table.shape[1]
    return jnp.take(emb_table, token_ids, axis=0) * math.sqrt(d_model)


if __name__ == "__main__":
    B, S = 2, 8                     # batch, sequence length
    VOCAB, D_MODEL = 50, 32

    key = jax.random.PRNGKey(0)
    k_emb, k_ids = jax.random.split(key)
    emb_table = jax.random.normal(k_emb, (VOCAB, D_MODEL), jnp.float32) * 0.1
    token_ids = jax.random.randint(k_ids, (B, S), 0, VOCAB, dtype=jnp.int32)

    ref = input_embeddings_ref(token_ids, emb_table)

    # Path A: small-vocab fast path (table resident in VMEM, MXU one-hot gather).
    embed_small = InputEmbeddings(emb_table)
    out_a = jax.block_until_ready(embed_small(token_ids))
    assert out_a.shape == (B, S, D_MODEL)
    assert jnp.allclose(out_a, ref, atol=1e-5, rtol=1e-5), "VMEM path mismatch"

    # Path B: large-vocab path (HBM table, per-row DMA gather), forced here so
    # both code paths are exercised and checked on the same inputs.
    embed_large = InputEmbeddings(emb_table, small_vocab_max=0)
    out_b = jax.block_until_ready(embed_large(token_ids))
    assert out_b.shape == (B, S, D_MODEL)
    assert jnp.allclose(out_b, ref, atol=1e-5, rtol=1e-5), "HBM path mismatch"

    print("KERNEL_OK")
</pallas_src>

<mosaic_0001>
module attributes {stable_mosaic.version = 11 : i64} {
  func.func @_vmem_gather_kernel(%arg0: i32, %arg1: memref<16x1xi32, #tpu.memory_space<vmem>>, %arg2: memref<50x32xf32, #tpu.memory_space<vmem>>, %arg3: memref<16x32xf32, #tpu.memory_space<vmem>>) attributes {dimension_semantics = [#tpu.dimension_semantics<parallel>], iteration_bounds = array<i64: 1>, scalar_prefetch = 0 : i64, scratch_operands = 0 : i64, tpu.core_type = #tpu.core_type<tc>, window_params = [{transform_indices = @transform_0, window_bounds = array<i64: 16, 1>}, {pipeline_mode = #tpu.pipeline_mode<synchronous>, transform_indices = @transform_1, window_bounds = array<i64: 50, 32>}, {transform_indices = @transform_2, window_bounds = array<i64: 16, 32>}]} {
    %c0 = arith.constant 0 : index
    %c0_0 = arith.constant 0 : index
    %0 = vector.load %arg1[%c0, %c0_0] : memref<16x1xi32, #tpu.memory_space<vmem>>, vector<16x1xi32>
    %1 = tpu.iota {dimensions = array<i32: 1>} : vector<16x50xi32>
    %2 = vector.broadcast %0 : vector<16x1xi32> to vector<16x50xi32>
    %3 = arith.cmpi eq, %1, %2 : vector<16x50xi32>
    %4 = arith.extui %3 : vector<16x50xi1> to vector<16x50xi32>
    %5 = arith.sitofp %4 : vector<16x50xi32> to vector<16x50xf32>
    %c0_1 = arith.constant 0 : index
    %c0_2 = arith.constant 0 : index
    %6 = vector.load %arg2[%c0_1, %c0_2] : memref<50x32xf32, #tpu.memory_space<vmem>>, vector<50x32xf32>
    %cst = arith.constant dense<0.000000e+00> : vector<16x32xf32>
    %7 = tpu.matmul %5, %6, %cst {dimension_numbers = #tpu.dot_dimension_numbers<[1], [0], [0], [1], [0, 0, 1, 1], [], []>} : vector<16x50xf32>, vector<50x32xf32>, vector<16x32xf32> -> vector<16x32xf32>
    %cst_3 = arith.constant 5.65685415 : f32
    %8 = vector.broadcast %cst_3 : f32 to vector<16x32xf32>
    %9 = arith.mulf %7, %8 : vector<16x32xf32>
    %c0_4 = arith.constant 0 : index
    %c0_5 = arith.constant 0 : index
    %10 = vector.load %arg3[%c0_4, %c0_5] : memref<16x32xf32, #tpu.memory_space<vmem>>, vector<16x32xf32>
    tpu.vector_store %arg3[%c0_4, %c0_5], %9 {strides = array<i32>} : memref<16x32xf32, #tpu.memory_space<vmem>>, vector<16x32xf32>,
    return
  }
  func.func @transform_0(%arg0: i32) -> (i32, i32) {
    %c0_i32 = arith.constant 0 : i32
    %c0_i32_0 = arith.constant 0 : i32
    return %arg0, %c0_i32 : i32, i32
  }
  func.func @transform_1(%arg0: i32) -> (i32, i32) {
    %c0_i32 = arith.constant 0 : i32
    %c0_i32_0 = arith.constant 0 : i32
    %c0_i32_1 = arith.constant 0 : i32
    return %c0_i32, %c0_i32_0 : i32, i32
  }
  func.func @transform_2(%arg0: i32) -> (i32, i32) {
    %c0_i32 = arith.constant 0 : i32
    %c0_i32_0 = arith.constant 0 : i32
    return %arg0, %c0_i32 : i32, i32
  }
}

</mosaic_0001>

<llo_original>
// kernel: tpu_custom_call.1
$region0: #{tpu_custom_call.1}
  #allocation0 [shape = 'u32[]', space=smem, size = 0x4, offset = 0x4, fixed_abs, tag = 'smem constant byte address 0x4 - core index']
  #allocation1 [shape = 'u32[144,128]{1,0:T(1,128)}', space=vmem, size = 0x12000, scoped, tag = 'internal scratch']
  %s0 = inlined_call_operand.vmem [shape: s32[16,1], index: 0, kind: input, shape index: {}]
  %s1 = inlined_call_operand.vmem [shape: f32[50,32], index: 1, kind: input, shape index: {}]
  %s2 = inlined_call_operand.hbm [shape: f32[16,32], index: 2, kind: output, shape index: {}]
  %s3 = sld [smem:[#allocation0]]
  $region18: #{tpu_custom_call.1} parent=0
    _
  %s5 = ssub.s32 1, %s3
  %s6 = scalar_select 0, %s5, %s3
  $region1: #{tpu_custom_call.1} parent=0
    #allocation2 [shape = 'u8[8192]{0}', space=vmem, size = 0x2000, scoped, tag = 'output window, operand 0, single buffered']
    #allocation3 [shape = 's32[1]{0}', space=sflag, size = 0x4, scoped, tag = 'scoped memory for tpu_custom_call.1']
    %7 = vsyncpa [#allocation3], 0
    // Predicated region
    $region2: #{tpu_custom_call.1} parent=1 // pred_check
      _
    $region3: #{tpu_custom_call.1} parent=1 // pred_check_branch
      %9 = sbr.rel (0) target = $region5
    $region4: #{tpu_custom_call.1} parent=1 // pred_region
      _
    $region5: #{tpu_custom_call.1} parent=1 // pred_fallthru
      _
    // Predicated region
    $region6: #{tpu_custom_call.1} parent=1 // pred_check
      _
    $region7: #{tpu_custom_call.1} parent=1 // pred_check_branch
      %11 = sbr.rel (0) target = $region9
    $region8: #{tpu_custom_call.1} parent=1 // pred_region
      _
    $region9: #{tpu_custom_call.1} parent=1 // pred_fallthru
      _
    %v12 = vld [vmem:[%s0] sm:$0xff]
    %v13 = vld [vmem:[%s0 + $0x8] sm:$0xff]
    %v14 = vlaneseq
    %v15 = vand.u32 %v14, 127
    %16 = vset.pattern.permute.xlu0 0
    %17 = vperm.xlu0 %16, %v12
    %v18 = vpop.permute.xlu0 %17
    %19 = vset.pattern.permute.xlu0 0
    %20 = vperm.xlu0 %19, %v13
    %v21 = vpop.permute.xlu0 %20
    %vm22 = vcmp.eq.s32.totalorder %v15, %v18
    %vm23 = vcmp.eq.s32.totalorder %v15, %v21
    %v24 = vsel %vm22, 1, 0
    %v25 = vsel %vm23, 1, 0
    %v26 = vcvt.s32.f32 %v24
    %v27 = vcvt.s32.f32 %v25
    %v28 = vld [vmem:[%s1] sm:$0xff]
    %v29 = vld [vmem:[%s1 + $0x8] sm:$0xff]
    %v30 = vld [vmem:[%s1 + $0x10] sm:$0xff]
    %v31 = vld [vmem:[%s1 + $0x18] sm:$0xff]
    %v32 = vld [vmem:[%s1 + $0x20] sm:$0xff]
    %v33 = vld [vmem:[%s1 + $0x28] sm:$0xff]
    %v34 = vld [vmem:[%s1 + $0x30] sm:$0x3]
    %vm35 = vcmask 408576
    %v37 = vsel %vm35, %v26, 0
    %v40 = vsel %vm35, %v27, 0
    %vm42 = vcmask 1041408
    %v44 = vsel %vm42, %v34, 0
    %46 = vmatprep.subr.mxu0 0.0
    %47 = vmatpush1.msra.mxu0 0.0
    %48 = vmatprep.subr.mxu0 0.0
    %49 = vmatpush1.msra.mxu0 0.0
    %50 = vmatprep.subr.mxu0 0.0
    %51 = vmatpush1.msra.mxu0 0.0
    %52 = vmatprep.subr.mxu0 0.0
    %53 = vmatpush1.msra.mxu0 0.0
    %54 = vmatprep.subr.mxu0 0.0
    %55 = vmatpush1.msra.mxu0 0.0
    %56 = vmatprep.subr.mxu0 0.0
    %57 = vmatpush1.msra.mxu0 0.0
    %58 = vmatprep.subr.mxu0 0.0
    %59 = vmatpush1.msra.mxu0 0.0
    %60 = vmatprep.subr.mxu0 0.0
    %61 = vmatpush1.msra.mxu0 0.0
    %62 = vmatprep.subr.mxu0 0.0
    %63 = vmatpush1.msra.mxu0 0.0
    %64 = vmatprep.subr.mxu0 0.0
    %65 = vmatpush1.msra.mxu0 %v44
    %66 = vmatprep.subr.mxu0 0.0
    %67 = vmatpush1.msra.mxu0 %v33
    %68 = vmatprep.subr.mxu0 0.0
    %69 = vmatpush1.msra.mxu0 %v32
    %70 = vmatprep.subr.mxu0 0.0
    %71 = vmatpush1.msra.mxu0 %v31
    %72 = vmatprep.subr.mxu0 0.0
    %73 = vmatpush1.msra.mxu0 %v30
    %74 = vmatprep.subr.mxu0 0.0
    %75 = vmatpush1.msra.mxu0 %v29
    %76 = vmatprep.subr.mxu0 0.0
    %77 = vmatpush1.msra.mxu0 %v28
    %78 = vmatprep.subr.mxu0 0.0
    %79 = vmatpush2.msra.mxu0 0.0
    %80 = vmatprep.subr.mxu0 0.0
    %81 = vmatpush2.msra.mxu0 0.0
    %82 = vmatprep.subr.mxu0 0.0
    %83 = vmatpush2.msra.mxu0 0.0
    %84 = vmatprep.subr.mxu0 0.0
    %85 = vmatpush2.msra.mxu0 0.0
    %86 = vmatprep.subr.mxu0 0.0
    %87 = vmatpush2.msra.mxu0 0.0
    %88 = vmatprep.subr.mxu0 0.0
    %89 = vmatpush2.msra.mxu0 0.0
    %90 = vmatprep.subr.mxu0 0.0
    %91 = vmatpush2.msra.mxu0 0.0
    %92 = vmatprep.subr.mxu0 0.0
    %93 = vmatpush2.msra.mxu0 0.0
    %94 = vmatprep.subr.mxu0 0.0
    %95 = vmatpush2.msra.mxu0 0.0
    %96 = vmatprep.subr.mxu0 0.0
    %97 = vmatpush2.msra.mxu0 0.0
    %98 = vmatprep.subr.mxu0 0.0
    %99 = vmatpush2.msra.mxu0 0.0
    %100 = vmatprep.subr.mxu0 0.0
    %101 = vmatpush2.msra.mxu0 0.0
    %102 = vmatprep.subr.mxu0 0.0
    %103 = vmatpush2.msra.mxu0 0.0
    %104 = vmatprep.subr.mxu0 0.0
    %105 = vmatpush2.msra.mxu0 0.0
    %106 = vmatprep.subr.mxu0 0.0
    %107 = vmatpush2.msra.mxu0 0.0
    %108 = vmatprep.subr.mxu0 0.0
    %109 = vmatpush2.msra.mxu0 0.0
    %110 = vmatprep.mubr.f32.mxu0 0.0
    %111 = vmatmul.mubr.f32.gmra.mxu0 %v37
    %v112 = vpop.f32.mrf.mxu0
    %v113 = vadd.f32 0.0, %v112
    %v114 = vpop.f32.mrf.mxu0
    %115 = vmatprep.mubr.f32.mxu0 0.0
    %116 = vmatmul.mubr.f32.gmra.mxu0 %v40
    %v117 = vpop.f32.mrf.mxu0
    %v118 = vadd.f32 0.0, %v117
    %v119 = vpop.f32.mrf.mxu0
    %120 = vdwg.mxu0
    %v121 = vmul.f32 %v113, 5.656854
    %v122 = vmul.f32 %v118, 5.656854
    %vm123 = vcmask 261120
    %124 = vst.msk [vmem:[#allocation2] sm:$0xff] %vm123, %v121
    %125 = vst.msk [vmem:[#allocation2 + $0x8] sm:$0xff] %vm123, %v122
    // Predicated region
    $region10: #{tpu_custom_call.1} parent=1 // pred_check
      _
    $region11: #{tpu_custom_call.1} parent=1 // pred_check_branch
      %127 = sbr.rel (0) target = $region13
    $region12: #{tpu_custom_call.1} parent=1 // pred_region
      %s129 = ssub.s32 256, 256
      %130 = vsyncadd [#allocation3], %s129
      %s131 = sshll.u32 [#allocation2], 4
      %s132 = int_to_ptr.vmem [resolvable:$true] %s131
      %137 = dma.vmem_to_hbm [thread:$0]  %s132, 256, %s2, [#allocation3], 128, 128, 8
    $region13: #{tpu_custom_call.1} parent=1 // pred_fallthru
      _
    // Predicated region
    $region14: #{tpu_custom_call.1} parent=1 // pred_check
      _
    $region15: #{tpu_custom_call.1} parent=1 // pred_check_branch
      %139 = sbr.rel (0) target = $region17
    $region16: #{tpu_custom_call.1} parent=1 // pred_region
      %140 = dma.done [#allocation3], 256
    $region17: #{tpu_custom_call.1} parent=1 // pred_fallthru
      _
    %141 = vsyncpa [#allocation3], 1

</llo_original>
